<compile_context>
chip_gen: v6e
topology: v6e:2x2x1
jax: 0.10.0
libtpu: 0.0.40
codegen_flags: <defaults>
</compile_context>

<pallas_src>
import functools
import math

import jax
import jax.numpy as jnp
from jax.experimental import pallas as pl
from jax.experimental.pallas import tpu as pltpu


def _hypernet_kernel(z_ref, w_ref, b_ref, out_ref):
    # z_ref:   (L, z_dim)  layer embeddings, f32 storage
    # w_ref:   (z_dim, N)  transposed Linear weight (bf16 default, or f32)
    # b_ref:   (1, N)      bias, f32
    # out_ref: (L, N)      lane-dense output block -> single wide unmasked store
    z = z_ref[...].astype(w_ref.dtype)  # cast activation at the MXU input
    h = jnp.dot(z, w_ref[...], preferred_element_type=jnp.float32)
    out_ref[...] = (h + b_ref[...]).astype(out_ref.dtype)


@functools.partial(
    jax.jit, static_argnames=("f_size", "out_size", "in_size", "out_dtype")
)
def hypernetwork_conv_batched(zs, w_t, b, *, f_size, out_size, in_size,
                              out_dtype=jnp.float32):
    """Batched Pallas equivalent of L calls to SingleHyperNetwork_conv.forward.

    zs:  (L, z_dim)     stacked layer embeddings (f32)
    w_t: (z_dim, N)     nn.Linear weight pre-transposed, N = out*in*f*f
                        (bf16 storage recommended; accumulation is always f32)
    b:   (N,)           nn.Linear bias
    ->   (L, out_size, in_size, f_size, f_size)   OIHW conv weights
    """
    L, z_dim = zs.shape
    n = out_size * in_size * f_size * f_size
    assert w_t.shape == (z_dim, n)
    assert b.shape == (n,)

    b2 = b.astype(jnp.float32).reshape(1, n)  # metadata-only reshape

    # Advisory cost hint so XLA overlaps this ~1 us call with neighbors.
    bytes_in = (zs.size * zs.dtype.itemsize
                + w_t.size * w_t.dtype.itemsize
                + n * 4)
    bytes_out = L * n * jnp.dtype(out_dtype).itemsize
    cost = pl.CostEstimate(flops=2 * L * z_dim * n,
                           transcendentals=0,
                           bytes_accessed=bytes_in + bytes_out)

    # Single invocation, no grid: every operand is a full-array block in VMEM.
    out = pl.pallas_call(
        _hypernet_kernel,
        out_shape=jax.ShapeDtypeStruct((L, n), out_dtype),
        in_specs=[
            pl.BlockSpec(memory_space=pltpu.MemorySpace.VMEM),  # zs  (L, z_dim)
            pl.BlockSpec(memory_space=pltpu.MemorySpace.VMEM),  # Wt  (z_dim, N)
            pl.BlockSpec(memory_space=pltpu.MemorySpace.VMEM),  # b   (1, N)
        ],
        out_specs=pl.BlockSpec(memory_space=pltpu.MemorySpace.VMEM),
        cost_estimate=cost,
    )(zs, w_t, b2)

    # Row-major reshape == torch h_final.view(out, in, f, f) per layer.
    # TODO(synk): fuse into the consuming conv kernel (or pre-permute w_t columns to
    # the consumer's layout) to avoid the padded (16,16,3,3) relayout of this output.
    return out.reshape(L, out_size, in_size, f_size, f_size)


def single_hypernetwork_conv(z, w_t, b, *, f_size, out_size, in_size,
                             out_dtype=jnp.float32):
    """Pallas equivalent of SingleHyperNetwork_conv.forward (single z)."""
    out = hypernetwork_conv_batched(
        z.reshape(1, -1), w_t, b,
        f_size=f_size, out_size=out_size, in_size=in_size, out_dtype=out_dtype)
    return out[0]


if __name__ == "__main__":
    # Module defaults: f_size=3, z_dim=64, out_size=16, in_size=16  -> N = 2304
    f_size, z_dim, out_size, in_size = 3, 64, 16, 16
    n = out_size * in_size * f_size * f_size

    key = jax.random.PRNGKey(0)
    k_z, k_w, k_zb = jax.random.split(key, 3)

    # Deterministic inputs / params.
    z = jax.random.normal(k_z, (z_dim,), dtype=jnp.float32)

    # nn.Linear weight: (N, z_dim), xavier_uniform_ ; bias: zeros.
    bound = math.sqrt(6.0 / (z_dim + n))
    w = jax.random.uniform(k_w, (n, z_dim), minval=-bound, maxval=bound,
                           dtype=jnp.float32)
    b = jnp.zeros((n,), dtype=jnp.float32)

    # --- f32 weights, single z: exact match with the PyTorch Linear semantics ----
    w_t_f32 = w.T  # (z_dim, N)
    out_f32 = jax.block_until_ready(
        single_hypernetwork_conv(z, w_t_f32, b,
                                 f_size=f_size, out_size=out_size, in_size=in_size))
    ref_f32 = (z @ w.T + b).reshape(out_size, in_size, f_size, f_size)
    assert out_f32.shape == (out_size, in_size, f_size, f_size)
    assert jnp.allclose(out_f32, ref_f32, atol=1e-5, rtol=1e-5)

    # --- bf16 weight storage (default path), batched over L=4 layer embeddings ---
    L = 4
    zs = jax.random.normal(k_zb, (L, z_dim), dtype=jnp.float32)
    w_t_bf16 = w.T.astype(jnp.bfloat16)
    out_b = jax.block_until_ready(
        hypernetwork_conv_batched(zs, w_t_bf16, b,
                                  f_size=f_size, out_size=out_size, in_size=in_size))
    assert out_b.shape == (L, out_size, in_size, f_size, f_size)
    # Reference: z cast to bf16 at the MXU, bf16 weights, f32 accumulate + f32 bias.
    ref_b = (zs.astype(jnp.bfloat16).astype(jnp.float32)
             @ w_t_bf16.astype(jnp.float32) + b
             ).reshape(L, out_size, in_size, f_size, f_size)
    assert jnp.allclose(out_b, ref_b, atol=2e-2, rtol=2e-2)

    print("KERNEL_OK")
</pallas_src>

<mosaic_0001>
module attributes {stable_mosaic.version = 11 : i64} {
  func.func @_hypernet_kernel(%arg0: memref<1x64xf32, #tpu.memory_space<vmem>>, %arg1: memref<64x2304xf32, #tpu.memory_space<vmem>>, %arg2: memref<1x2304xf32, #tpu.memory_space<vmem>>, %arg3: memref<1x2304xf32, #tpu.memory_space<vmem>>) attributes {dimension_semantics = [], scalar_prefetch = 0 : i64, scratch_operands = 0 : i64, tpu.core_type = #tpu.core_type<tc>} {
    %c0 = arith.constant 0 : index
    %c0_0 = arith.constant 0 : index
    %0 = vector.load %arg0[%c0, %c0_0] : memref<1x64xf32, #tpu.memory_space<vmem>>, vector<1x64xf32>
    %c0_1 = arith.constant 0 : index
    %c0_2 = arith.constant 0 : index
    %1 = vector.load %arg1[%c0_1, %c0_2] : memref<64x2304xf32, #tpu.memory_space<vmem>>, vector<64x2304xf32>
    %cst = arith.constant dense<0.000000e+00> : vector<1x2304xf32>
    %2 = tpu.matmul %0, %1, %cst {dimension_numbers = #tpu.dot_dimension_numbers<[1], [0], [0], [1], [0, 0, 1, 1], [], []>} : vector<1x64xf32>, vector<64x2304xf32>, vector<1x2304xf32> -> vector<1x2304xf32>
    %c0_3 = arith.constant 0 : index
    %c0_4 = arith.constant 0 : index
    %3 = vector.load %arg2[%c0_3, %c0_4] : memref<1x2304xf32, #tpu.memory_space<vmem>>, vector<1x2304xf32>
    %4 = arith.addf %2, %3 : vector<1x2304xf32>
    %c0_5 = arith.constant 0 : index
    %c0_6 = arith.constant 0 : index
    %5 = vector.load %arg3[%c0_5, %c0_6] : memref<1x2304xf32, #tpu.memory_space<vmem>>, vector<1x2304xf32>
    tpu.vector_store %arg3[%c0_5, %c0_6], %4 {strides = array<i32>} : memref<1x2304xf32, #tpu.memory_space<vmem>>, vector<1x2304xf32>,
    return
  }
}

</mosaic_0001>

<llo_original>
// kernel: hypernetwork_conv_batched.1
$region0: #{hypernetwork_conv_batched.1}
  #allocation0 [shape = 'u32[]', space=smem, size = 0x4, offset = 0x4, fixed_abs, tag = 'smem constant byte address 0x4 - core index']
  #allocation1 [shape = 'u32[144,128]{1,0:T(1,128)}', space=vmem, size = 0x12000, scoped, tag = 'internal scratch']
  %s0 = inlined_call_operand.vmem [shape: f32[1,64], index: 0, kind: input, shape index: {}]
  %s1 = inlined_call_operand.hbm [shape: f32[64,2304], index: 1, kind: input, shape index: {}]
  %s2 = inlined_call_operand.vmem [shape: f32[1,2304], index: 2, kind: input, shape index: {}]
  %s3 = inlined_call_operand.vmem [shape: f32[1,2304], index: 3, kind: output, shape index: {}]
  %s4 = sld [smem:[#allocation0]]
  $region26: #{hypernetwork_conv_batched.1} parent=0
    _
  %s6 = ssub.s32 1, %s4
  %s7 = scalar_select 0, %s6, %s4
  $region1: #{hypernetwork_conv_batched.1} parent=0
    #allocation2 [shape = 'u8[589824]{0}', space=vmem, size = 0x90000, scoped, tag = 'input window, operand 1, single buffered']
    #allocation3 [shape = 's32[1]{0}', space=sflag, size = 0x4, scoped, tag = 'scoped memory for hypernetwork_conv_batched.1']
    %8 = vsyncpa [#allocation3], 0
    // Predicated region
    $region2: #{hypernetwork_conv_batched.1} parent=1 // pred_check
      _
    $region3: #{hypernetwork_conv_batched.1} parent=1 // pred_check_branch
      %10 = sbr.rel (0) target = $region5
    $region4: #{hypernetwork_conv_batched.1} parent=1 // pred_region
      _
    $region5: #{hypernetwork_conv_batched.1} parent=1 // pred_fallthru
      _
    // Predicated region
    $region6: #{hypernetwork_conv_batched.1} parent=1 // pred_check
      _
    $region7: #{hypernetwork_conv_batched.1} parent=1 // pred_check_branch
      %12 = sbr.rel (0) target = $region9
    $region8: #{hypernetwork_conv_batched.1} parent=1 // pred_region
      %s14 = ssub.s32 18432, 18432
      %15 = vsyncadd [#allocation3], %s14
      %s16 = sshll.u32 [#allocation2], 4
      %s17 = int_to_ptr.vmem [resolvable:$true] %s16
      %22 = dma.hbm_to_vmem [thread:$0]  %s1, 18432, %s17, [#allocation3], 2304, 2304, 144
    $region9: #{hypernetwork_conv_batched.1} parent=1 // pred_fallthru
      _
    // Predicated region
    $region10: #{hypernetwork_conv_batched.1} parent=1 // pred_check
      _
    $region11: #{hypernetwork_conv_batched.1} parent=1 // pred_check_branch
      %24 = sbr.rel (0) target = $region13
    $region12: #{hypernetwork_conv_batched.1} parent=1 // pred_region
      _
    $region13: #{hypernetwork_conv_batched.1} parent=1 // pred_fallthru
      _
    // Predicated region
    $region14: #{hypernetwork_conv_batched.1} parent=1 // pred_check
      _
    $region15: #{hypernetwork_conv_batched.1} parent=1 // pred_check_branch
      %26 = sbr.rel (0) target = $region17
    $region16: #{hypernetwork_conv_batched.1} parent=1 // pred_region
      %27 = dma.done [#allocation3], 18432
    $region17: #{hypernetwork_conv_batched.1} parent=1 // pred_fallthru
      _
    %v28 = vld [vmem:[%s0] sm:$0x1]
    %v29 = vld [vmem:[#allocation2] sm:$0xff]
    %v30 = vld [vmem:[#allocation2 + $0x8] sm:$0xff]
    %v31 = vld [vmem:[#allocation2 + $0x10] sm:$0xff]
    %v32 = vld [vmem:[#allocation2 + $0x18] sm:$0xff]
    %v33 = vld [vmem:[#allocation2 + $0x20] sm:$0xff]
    %v34 = vld [vmem:[#allocation2 + $0x28] sm:$0xff]
    %v35 = vld [vmem:[#allocation2 + $0x30] sm:$0xff]
    %v36 = vld [vmem:[#allocation2 + $0x38] sm:$0xff]
    %v37 = vld [vmem:[#allocation2 + $0x40] sm:$0xff]
    %v38 = vld [vmem:[#allocation2 + $0x48] sm:$0xff]
    %v39 = vld [vmem:[#allocation2 + $0x50] sm:$0xff]
    %v40 = vld [vmem:[#allocation2 + $0x58] sm:$0xff]
    %v41 = vld [vmem:[#allocation2 + $0x60] sm:$0xff]
    %v42 = vld [vmem:[#allocation2 + $0x68] sm:$0xff]
    %v43 = vld [vmem:[#allocation2 + $0x70] sm:$0xff]
    %v44 = vld [vmem:[#allocation2 + $0x78] sm:$0xff]
    %v45 = vld [vmem:[#allocation2 + $0x80] sm:$0xff]
    %v46 = vld [vmem:[#allocation2 + $0x88] sm:$0xff]
    %v47 = vld [vmem:[#allocation2 + $0x90] sm:$0xff]
    %v48 = vld [vmem:[#allocation2 + $0x98] sm:$0xff]
    %v49 = vld [vmem:[#allocation2 + $0xa0] sm:$0xff]
    %v50 = vld [vmem:[#allocation2 + $0xa8] sm:$0xff]
    %v51 = vld [vmem:[#allocation2 + $0xb0] sm:$0xff]
    %v52 = vld [vmem:[#allocation2 + $0xb8] sm:$0xff]
    %v53 = vld [vmem:[#allocation2 + $0xc0] sm:$0xff]
    %v54 = vld [vmem:[#allocation2 + $0xc8] sm:$0xff]
    %v55 = vld [vmem:[#allocation2 + $0xd0] sm:$0xff]
    %v56 = vld [vmem:[#allocation2 + $0xd8] sm:$0xff]
    %v57 = vld [vmem:[#allocation2 + $0xe0] sm:$0xff]
    %v58 = vld [vmem:[#allocation2 + $0xe8] sm:$0xff]
    %v59 = vld [vmem:[#allocation2 + $0xf0] sm:$0xff]
    %v60 = vld [vmem:[#allocation2 + $0xf8] sm:$0xff]
    %v61 = vld [vmem:[#allocation2 + $0x100] sm:$0xff]
    %v62 = vld [vmem:[#allocation2 + $0x108] sm:$0xff]
    %v63 = vld [vmem:[#allocation2 + $0x110] sm:$0xff]
    %v64 = vld [vmem:[#allocation2 + $0x118] sm:$0xff]
    %v65 = vld [vmem:[#allocation2 + $0x120] sm:$0xff]
    %v66 = vld [vmem:[#allocation2 + $0x128] sm:$0xff]
    %v67 = vld [vmem:[#allocation2 + $0x130] sm:$0xff]
    %v68 = vld [vmem:[#allocation2 + $0x138] sm:$0xff]
    %v69 = vld [vmem:[#allocation2 + $0x140] sm:$0xff]
    %v70 = vld [vmem:[#allocation2 + $0x148] sm:$0xff]
    %v71 = vld [vmem:[#allocation2 + $0x150] sm:$0xff]
    %v72 = vld [vmem:[#allocation2 + $0x158] sm:$0xff]
    %v73 = vld [vmem:[#allocation2 + $0x160] sm:$0xff]
    %v74 = vld [vmem:[#allocation2 + $0x168] sm:$0xff]
    %v75 = vld [vmem:[#allocation2 + $0x170] sm:$0xff]
    %v76 = vld [vmem:[#allocation2 + $0x178] sm:$0xff]
    %v77 = vld [vmem:[#allocation2 + $0x180] sm:$0xff]
    %v78 = vld [vmem:[#allocation2 + $0x188] sm:$0xff]
    %v79 = vld [vmem:[#allocation2 + $0x190] sm:$0xff]
    %v80 = vld [vmem:[#allocation2 + $0x198] sm:$0xff]
    %v81 = vld [vmem:[#allocation2 + $0x1a0] sm:$0xff]
    %v82 = vld [vmem:[#allocation2 + $0x1a8] sm:$0xff]
    %v83 = vld [vmem:[#allocation2 + $0x1b0] sm:$0xff]
    %v84 = vld [vmem:[#allocation2 + $0x1b8] sm:$0xff]
    %v85 = vld [vmem:[#allocation2 + $0x1c0] sm:$0xff]
    %v86 = vld [vmem:[#allocation2 + $0x1c8] sm:$0xff]
    %v87 = vld [vmem:[#allocation2 + $0x1d0] sm:$0xff]
    %v88 = vld [vmem:[#allocation2 + $0x1d8] sm:$0xff]
    %v89 = vld [vmem:[#allocation2 + $0x1e0] sm:$0xff]
    %v90 = vld [vmem:[#allocation2 + $0x1e8] sm:$0xff]
    %v91 = vld [vmem:[#allocation2 + $0x1f0] sm:$0xff]
    %v92 = vld [vmem:[#allocation2 + $0x1f8] sm:$0xff]
    %v93 = vld [vmem:[#allocation2 + $0x200] sm:$0xff]
    %v94 = vld [vmem:[#allocation2 + $0x208] sm:$0xff]
    %v95 = vld [vmem:[#allocation2 + $0x210] sm:$0xff]
    %v96 = vld [vmem:[#allocation2 + $0x218] sm:$0xff]
    %v97 = vld [vmem:[#allocation2 + $0x220] sm:$0xff]
    %v98 = vld [vmem:[#allocation2 + $0x228] sm:$0xff]
    %v99 = vld [vmem:[#allocation2 + $0x230] sm:$0xff]
    %v100 = vld [vmem:[#allocation2 + $0x238] sm:$0xff]
    %v101 = vld [vmem:[#allocation2 + $0x240] sm:$0xff]
    %v102 = vld [vmem:[#allocation2 + $0x248] sm:$0xff]
    %v103 = vld [vmem:[#allocation2 + $0x250] sm:$0xff]
    %v104 = vld [vmem:[#allocation2 + $0x258] sm:$0xff]
    %v105 = vld [vmem:[#allocation2 + $0x260] sm:$0xff]
    %v106 = vld [vmem:[#allocation2 + $0x268] sm:$0xff]
    %v107 = vld [vmem:[#allocation2 + $0x270] sm:$0xff]
    %v108 = vld [vmem:[#allocation2 + $0x278] sm:$0xff]
    %v109 = vld [vmem:[#allocation2 + $0x280] sm:$0xff]
    %v110 = vld [vmem:[#allocation2 + $0x288] sm:$0xff]
    %v111 = vld [vmem:[#allocation2 + $0x290] sm:$0xff]
    %v112 = vld [vmem:[#allocation2 + $0x298] sm:$0xff]
    %v113 = vld [vmem:[#allocation2 + $0x2a0] sm:$0xff]
    %v114 = vld [vmem:[#allocation2 + $0x2a8] sm:$0xff]
    %v115 = vld [vmem:[#allocation2 + $0x2b0] sm:$0xff]
    %v116 = vld [vmem:[#allocation2 + $0x2b8] sm:$0xff]
    %v117 = vld [vmem:[#allocation2 + $0x2c0] sm:$0xff]
    %v118 = vld [vmem:[#allocation2 + $0x2c8] sm:$0xff]
    %v119 = vld [vmem:[#allocation2 + $0x2d0] sm:$0xff]
    %v120 = vld [vmem:[#allocation2 + $0x2d8] sm:$0xff]
    %v121 = vld [vmem:[#allocation2 + $0x2e0] sm:$0xff]
    %v122 = vld [vmem:[#allocation2 + $0x2e8] sm:$0xff]
    %v123 = vld [vmem:[#allocation2 + $0x2f0] sm:$0xff]
    %v124 = vld [vmem:[#allocation2 + $0x2f8] sm:$0xff]
    %v125 = vld [vmem:[#allocation2 + $0x300] sm:$0xff]
    %v126 = vld [vmem:[#allocation2 + $0x308] sm:$0xff]
    %v127 = vld [vmem:[#allocation2 + $0x310] sm:$0xff]
    %v128 = vld [vmem:[#allocation2 + $0x318] sm:$0xff]
    %v129 = vld [vmem:[#allocation2 + $0x320] sm:$0xff]
    %v130 = vld [vmem:[#allocation2 + $0x328] sm:$0xff]
    %v131 = vld [vmem:[#allocation2 + $0x330] sm:$0xff]
    %v132 = vld [vmem:[#allocation2 + $0x338] sm:$0xff]
    %v133 = vld [vmem:[#allocation2 + $0x340] sm:$0xff]
    %v134 = vld [vmem:[#allocation2 + $0x348] sm:$0xff]
    %v135 = vld [vmem:[#allocation2 + $0x350] sm:$0xff]
    %v136 = vld [vmem:[#allocation2 + $0x358] sm:$0xff]
    %v137 = vld [vmem:[#allocation2 + $0x360] sm:$0xff]
    %v138 = vld [vmem:[#allocation2 + $0x368] sm:$0xff]
    %v139 = vld [vmem:[#allocation2 + $0x370] sm:$0xff]
    %v140 = vld [vmem:[#allocation2 + $0x378] sm:$0xff]
    %v141 = vld [vmem:[#allocation2 + $0x380] sm:$0xff]
    %v142 = vld [vmem:[#allocation2 + $0x388] sm:$0xff]
    %v143 = vld [vmem:[#allocation2 + $0x390] sm:$0xff]
    %v144 = vld [vmem:[#allocation2 + $0x398] sm:$0xff]
    %v145 = vld [vmem:[#allocation2 + $0x3a0] sm:$0xff]
    %v146 = vld [vmem:[#allocation2 + $0x3a8] sm:$0xff]
    %v147 = vld [vmem:[#allocation2 + $0x3b0] sm:$0xff]
    %v148 = vld [vmem:[#allocation2 + $0x3b8] sm:$0xff]
    %v149 = vld [vmem:[#allocation2 + $0x3c0] sm:$0xff]
    %v150 = vld [vmem:[#allocation2 + $0x3c8] sm:$0xff]
    %v151 = vld [vmem:[#allocation2 + $0x3d0] sm:$0xff]
    %v152 = vld [vmem:[#allocation2 + $0x3d8] sm:$0xff]
    %v153 = vld [vmem:[#allocation2 + $0x3e0] sm:$0xff]
    %v154 = vld [vmem:[#allocation2 + $0x3e8] sm:$0xff]
    %v155 = vld [vmem:[#allocation2 + $0x3f0] sm:$0xff]
    %v156 = vld [vmem:[#allocation2 + $0x3f8] sm:$0xff]
    %v157 = vld [vmem:[#allocation2 + $0x400] sm:$0xff]
    %v158 = vld [vmem:[#allocation2 + $0x408] sm:$0xff]
    %v159 = vld [vmem:[#allocation2 + $0x410] sm:$0xff]
    %v160 = vld [vmem:[#allocation2 + $0x418] sm:$0xff]
    %v161 = vld [vmem:[#allocation2 + $0x420] sm:$0xff]
    %v162 = vld [vmem:[#allocation2 + $0x428] sm:$0xff]
    %v163 = vld [vmem:[#allocation2 + $0x430] sm:$0xff]
    %v164 = vld [vmem:[#allocation2 + $0x438] sm:$0xff]
    %v165 = vld [vmem:[#allocation2 + $0x440] sm:$0xff]
    %v166 = vld [vmem:[#allocation2 + $0x448] sm:$0xff]
    %v167 = vld [vmem:[#allocation2 + $0x450] sm:$0xff]
    %v168 = vld [vmem:[#allocation2 + $0x458] sm:$0xff]
    %v169 = vld [vmem:[#allocation2 + $0x460] sm:$0xff]
    %v170 = vld [vmem:[#allocation2 + $0x468] sm:$0xff]
    %v171 = vld [vmem:[#allocation2 + $0x470] sm:$0xff]
    %v172 = vld [vmem:[#allocation2 + $0x478] sm:$0xff]
    %v173 = vld [vmem:[%s2] sm:$0xff]
    %v174 = vld [vmem:[%s2 + $0x8] sm:$0xff]
    %v175 = vld [vmem:[%s2 + $0x10] sm:$0x3]
    %v179 = vlaneseq
    %v180 = vshrl.u32 %v179, 7
    %v181 = vsub.s32 0, %v180
    %v182 = vrot.slane %v173, %v181
    %v183 = vlaneseq
    %v184 = vshrl.u32 %v183, 7
    %v185 = vsub.s32 1, %v184
    %v186 = vrot.slane %v173, %v185
    %v187 = vlaneseq
    %v188 = vshrl.u32 %v187, 7
    %v189 = vsub.s32 2, %v188
    %v190 = vrot.slane %v173, %v189
    %v191 = vlaneseq
    %v192 = vshrl.u32 %v191, 7
    %v193 = vsub.s32 3, %v192
    %v194 = vrot.slane %v173, %v193
    %v195 = vlaneseq
    %v196 = vshrl.u32 %v195, 7
    %v197 = vsub.s32 4, %v196
    %v198 = vrot.slane %v173, %v197
    %v199 = vlaneseq
    %v200 = vshrl.u32 %v199, 7
    %v201 = vsub.s32 5, %v200
    %v202 = vrot.slane %v173, %v201
    %v203 = vlaneseq
    %v204 = vshrl.u32 %v203, 7
    %v205 = vsub.s32 6, %v204
    %v206 = vrot.slane %v173, %v205
    %v207 = vlaneseq
    %v208 = vshrl.u32 %v207, 7
    %v209 = vsub.s32 7, %v208
    %v210 = vrot.slane %v173, %v209
    %v211 = vlaneseq
    %v212 = vshrl.u32 %v211, 7
    %v213 = vsub.s32 0, %v212
    %v214 = vrot.slane %v174, %v213
    %v215 = vlaneseq
    %v216 = vshrl.u32 %v215, 7
    %v217 = vsub.s32 1, %v216
    %v218 = vrot.slane %v174, %v217
    %v219 = vlaneseq
    %v220 = vshrl.u32 %v219, 7
    %v221 = vsub.s32 2, %v220
    %v222 = vrot.slane %v174, %v221
    %v223 = vlaneseq
    %v224 = vshrl.u32 %v223, 7
    %v225 = vsub.s32 3, %v224
    %v226 = vrot.slane %v174, %v225
    %v227 = vlaneseq
    %v228 = vshrl.u32 %v227, 7
    %v229 = vsub.s32 4, %v228
    %v230 = vrot.slane %v174, %v229
    %v231 = vlaneseq
    %v232 = vshrl.u32 %v231, 7
    %v233 = vsub.s32 5, %v232
    %v234 = vrot.slane %v174, %v233
    %v235 = vlaneseq
    %v236 = vshrl.u32 %v235, 7
    %v237 = vsub.s32 6, %v236
    %v238 = vrot.slane %v174, %v237
    %v239 = vlaneseq
    %v240 = vshrl.u32 %v239, 7
    %v241 = vsub.s32 7, %v240
    %v242 = vrot.slane %v174, %v241
    %v243 = vlaneseq
    %v244 = vshrl.u32 %v243, 7
    %v245 = vsub.s32 0, %v244
    %v246 = vrot.slane %v175, %v245
    %v247 = vlaneseq
    %v248 = vshrl.u32 %v247, 7
    %v249 = vsub.s32 1, %v248
    %v250 = vrot.slane %v175, %v249
    %vm269 = vcmask 523264
    %v271 = vsel %vm269, %v28, 0
    %273 = vmatprep.subr.mxu0 0.0
    %274 = vmatpush1.msra.mxu0 0.0
    %275 = vmatprep.subr.mxu0 0.0
    %276 = vmatpush1.msra.mxu0 0.0
    %277 = vmatprep.subr.mxu0 0.0
    %278 = vmatpush1.msra.mxu0 0.0
    %279 = vmatprep.subr.mxu0 0.0
    %280 = vmatpush1.msra.mxu0 0.0
    %281 = vmatprep.subr.mxu0 0.0
    %282 = vmatpush1.msra.mxu0 0.0
    %283 = vmatprep.subr.mxu0 0.0
    %284 = vmatpush1.msra.mxu0 0.0
    %285 = vmatprep.subr.mxu0 0.0
    %286 = vmatpush1.msra.mxu0 0.0
    %287 = vmatprep.subr.mxu0 0.0
    %288 = vmatpush1.msra.mxu0 0.0
    %289 = vmatprep.subr.mxu0 %v156
    %290 = vmatpush1.msra.mxu0 %v155
    %291 = vmatprep.subr.mxu0 %v138
    %292 = vmatpush1.msra.mxu0 %v137
    %293 = vmatprep.subr.mxu0 %v120
    %294 = vmatpush1.msra.mxu0 %v119
    %295 = vmatprep.subr.mxu0 %v102
    %296 = vmatpush1.msra.mxu0 %v101
    %297 = vmatprep.subr.mxu0 %v84
    %298 = vmatpush1.msra.mxu0 %v83
    %299 = vmatprep.subr.mxu0 %v66
    %300 = vmatpush1.msra.mxu0 %v65
    %301 = vmatprep.subr.mxu0 %v48
    %302 = vmatpush1.msra.mxu0 %v47
    %303 = vmatprep.subr.mxu0 %v30
    %304 = vmatpush1.msra.mxu0 %v29
    %305 = vmatprep.subr.mxu0 0.0
    %306 = vmatpush2.msra.mxu0 0.0
    %307 = vmatprep.subr.mxu0 0.0
    %308 = vmatpush2.msra.mxu0 0.0
    %309 = vmatprep.subr.mxu0 0.0
    %310 = vmatpush2.msra.mxu0 0.0
    %311 = vmatprep.subr.mxu0 0.0
    %312 = vmatpush2.msra.mxu0 0.0
    %313 = vmatprep.subr.mxu0 0.0
    %314 = vmatpush2.msra.mxu0 0.0
    %315 = vmatprep.subr.mxu0 0.0
    %316 = vmatpush2.msra.mxu0 0.0
    %317 = vmatprep.subr.mxu0 0.0
    %318 = vmatpush2.msra.mxu0 0.0
    %319 = vmatprep.subr.mxu0 0.0
    %320 = vmatpush2.msra.mxu0 0.0
    %321 = vmatprep.subr.mxu0 0.0
    %322 = vmatpush2.msra.mxu0 0.0
    %323 = vmatprep.subr.mxu0 0.0
    %324 = vmatpush2.msra.mxu0 0.0
    %325 = vmatprep.subr.mxu0 0.0
    %326 = vmatpush2.msra.mxu0 0.0
    %327 = vmatprep.subr.mxu0 0.0
    %328 = vmatpush2.msra.mxu0 0.0
    %329 = vmatprep.subr.mxu0 0.0
    %330 = vmatpush2.msra.mxu0 0.0
    %331 = vmatprep.subr.mxu0 0.0
    %332 = vmatpush2.msra.mxu0 0.0
    %333 = vmatprep.subr.mxu0 0.0
    %334 = vmatpush2.msra.mxu0 0.0
    %335 = vmatprep.subr.mxu0 0.0
    %336 = vmatpush2.msra.mxu0 0.0
    %337 = vmatprep.mubr.f32.mxu0 0.0
    %338 = vmatmul.mubr.f32.gmra.mxu0 %v271
    %v339 = vpop.f32.mrf.mxu0
    %v340 = vadd.f32 %v182, %v339
    %v341 = vpop.f32.mrf.mxu0
    %v342 = vadd.f32 %v186, %v341
    %343 = vdwg.mxu0
    %344 = vmatprep.subr.mxu0 0.0
    %345 = vmatpush1.msra.mxu0 0.0
    %346 = vmatprep.subr.mxu0 0.0
    %347 = vmatpush1.msra.mxu0 0.0
    %348 = vmatprep.subr.mxu0 0.0
    %349 = vmatpush1.msra.mxu0 0.0
    %350 = vmatprep.subr.mxu0 0.0
    %351 = vmatpush1.msra.mxu0 0.0
    %352 = vmatprep.subr.mxu0 0.0
    %353 = vmatpush1.msra.mxu0 0.0
    %354 = vmatprep.subr.mxu0 0.0
    %355 = vmatpush1.msra.mxu0 0.0
    %356 = vmatprep.subr.mxu0 0.0
    %357 = vmatpush1.msra.mxu0 0.0
    %358 = vmatprep.subr.mxu0 0.0
    %359 = vmatpush1.msra.mxu0 0.0
    %360 = vmatprep.subr.mxu0 %v158
    %361 = vmatpush1.msra.mxu0 %v157
    %362 = vmatprep.subr.mxu0 %v140
    %363 = vmatpush1.msra.mxu0 %v139
    %364 = vmatprep.subr.mxu0 %v122
    %365 = vmatpush1.msra.mxu0 %v121
    %366 = vmatprep.subr.mxu0 %v104
    %367 = vmatpush1.msra.mxu0 %v103
    %368 = vmatprep.subr.mxu0 %v86
    %369 = vmatpush1.msra.mxu0 %v85
    %370 = vmatprep.subr.mxu0 %v68
    %371 = vmatpush1.msra.mxu0 %v67
    %372 = vmatprep.subr.mxu0 %v50
    %373 = vmatpush1.msra.mxu0 %v49
    %374 = vmatprep.subr.mxu0 %v32
    %375 = vmatpush1.msra.mxu0 %v31
    %376 = vmatprep.subr.mxu0 0.0
    %377 = vmatpush2.msra.mxu0 0.0
    %378 = vmatprep.subr.mxu0 0.0
    %379 = vmatpush2.msra.mxu0 0.0
    %380 = vmatprep.subr.mxu0 0.0
    %381 = vmatpush2.msra.mxu0 0.0
    %382 = vmatprep.subr.mxu0 0.0
    %383 = vmatpush2.msra.mxu0 0.0
    %384 = vmatprep.subr.mxu0 0.0
    %385 = vmatpush2.msra.mxu0 0.0
    %386 = vmatprep.subr.mxu0 0.0
    %387 = vmatpush2.msra.mxu0 0.0
    %388 = vmatprep.subr.mxu0 0.0
    %389 = vmatpush2.msra.mxu0 0.0
    %390 = vmatprep.subr.mxu0 0.0
    %391 = vmatpush2.msra.mxu0 0.0
    %392 = vmatprep.subr.mxu0 0.0
    %393 = vmatpush2.msra.mxu0 0.0
    %394 = vmatprep.subr.mxu0 0.0
    %395 = vmatpush2.msra.mxu0 0.0
    %396 = vmatprep.subr.mxu0 0.0
    %397 = vmatpush2.msra.mxu0 0.0
    %398 = vmatprep.subr.mxu0 0.0
    %399 = vmatpush2.msra.mxu0 0.0
    %400 = vmatprep.subr.mxu0 0.0
    %401 = vmatpush2.msra.mxu0 0.0
    %402 = vmatprep.subr.mxu0 0.0
    %403 = vmatpush2.msra.mxu0 0.0
    %404 = vmatprep.subr.mxu0 0.0
    %405 = vmatpush2.msra.mxu0 0.0
    %406 = vmatprep.subr.mxu0 0.0
    %407 = vmatpush2.msra.mxu0 0.0
    %408 = vmatprep.mubr.f32.mxu0 0.0
    %409 = vmatmul.mubr.f32.gmra.mxu0 %v271
    %v410 = vpop.f32.mrf.mxu0
    %v411 = vadd.f32 %v190, %v410
    %v412 = vpop.f32.mrf.mxu0
    %v413 = vadd.f32 %v194, %v412
    %414 = vdwg.mxu0
    %415 = vmatprep.subr.mxu0 0.0
    %416 = vmatpush1.msra.mxu0 0.0
    %417 = vmatprep.subr.mxu0 0.0
    %418 = vmatpush1.msra.mxu0 0.0
    %419 = vmatprep.subr.mxu0 0.0
    %420 = vmatpush1.msra.mxu0 0.0
    %421 = vmatprep.subr.mxu0 0.0
    %422 = vmatpush1.msra.mxu0 0.0
    %423 = vmatprep.subr.mxu0 0.0
    %424 = vmatpush1.msra.mxu0 0.0
    %425 = vmatprep.subr.mxu0 0.0
    %426 = vmatpush1.msra.mxu0 0.0
    %427 = vmatprep.subr.mxu0 0.0
    %428 = vmatpush1.msra.mxu0 0.0
    %429 = vmatprep.subr.mxu0 0.0
    %430 = vmatpush1.msra.mxu0 0.0
    %431 = vmatprep.subr.mxu0 %v160
    %432 = vmatpush1.msra.mxu0 %v159
    %433 = vmatprep.subr.mxu0 %v142
    %434 = vmatpush1.msra.mxu0 %v141
    %435 = vmatprep.subr.mxu0 %v124
    %436 = vmatpush1.msra.mxu0 %v123
    %437 = vmatprep.subr.mxu0 %v106
    %438 = vmatpush1.msra.mxu0 %v105
    %439 = vmatprep.subr.mxu0 %v88
    %440 = vmatpush1.msra.mxu0 %v87
    %441 = vmatprep.subr.mxu0 %v70
    %442 = vmatpush1.msra.mxu0 %v69
    %443 = vmatprep.subr.mxu0 %v52
    %444 = vmatpush1.msra.mxu0 %v51
    %445 = vmatprep.subr.mxu0 %v34
    %446 = vmatpush1.msra.mxu0 %v33
    %447 = vmatprep.subr.mxu0 0.0
    %448 = vmatpush2.msra.mxu0 0.0
    %449 = vmatprep.subr.mxu0 0.0
    %450 = vmatpush2.msra.mxu0 0.0
    %451 = vmatprep.subr.mxu0 0.0
    %452 = vmatpush2.msra.mxu0 0.0
    %453 = vmatprep.subr.mxu0 0.0
    %454 = vmatpush2.msra.mxu0 0.0
    %455 = vmatprep.subr.mxu0 0.0
    %456 = vmatpush2.msra.mxu0 0.0
    %457 = vmatprep.subr.mxu0 0.0
    %458 = vmatpush2.msra.mxu0 0.0
    %459 = vmatprep.subr.mxu0 0.0
    %460 = vmatpush2.msra.mxu0 0.0
    %461 = vmatprep.subr.mxu0 0.0
    %462 = vmatpush2.msra.mxu0 0.0
    %463 = vmatprep.subr.mxu0 0.0
    %464 = vmatpush2.msra.mxu0 0.0
    %465 = vmatprep.subr.mxu0 0.0
    %466 = vmatpush2.msra.mxu0 0.0
    %467 = vmatprep.subr.mxu0 0.0
    %468 = vmatpush2.msra.mxu0 0.0
    %469 = vmatprep.subr.mxu0 0.0
    %470 = vmatpush2.msra.mxu0 0.0
    %471 = vmatprep.subr.mxu0 0.0
    %472 = vmatpush2.msra.mxu0 0.0
    %473 = vmatprep.subr.mxu0 0.0
    %474 = vmatpush2.msra.mxu0 0.0
    %475 = vmatprep.subr.mxu0 0.0
    %476 = vmatpush2.msra.mxu0 0.0
    %477 = vmatprep.subr.mxu0 0.0
    %478 = vmatpush2.msra.mxu0 0.0
    %479 = vmatprep.mubr.f32.mxu0 0.0
    %480 = vmatmul.mubr.f32.gmra.mxu0 %v271
    %v481 = vpop.f32.mrf.mxu0
    %v482 = vadd.f32 %v198, %v481
    %v483 = vpop.f32.mrf.mxu0
    %v484 = vadd.f32 %v202, %v483
    %485 = vdwg.mxu0
    %486 = vmatprep.subr.mxu0 0.0
    %487 = vmatpush1.msra.mxu0 0.0
    %488 = vmatprep.subr.mxu0 0.0
    %489 = vmatpush1.msra.mxu0 0.0
    %490 = vmatprep.subr.mxu0 0.0
    %491 = vmatpush1.msra.mxu0 0.0
    %492 = vmatprep.subr.mxu0 0.0
    %493 = vmatpush1.msra.mxu0 0.0
    %494 = vmatprep.subr.mxu0 0.0
    %495 = vmatpush1.msra.mxu0 0.0
    %496 = vmatprep.subr.mxu0 0.0
    %497 = vmatpush1.msra.mxu0 0.0
    %498 = vmatprep.subr.mxu0 0.0
    %499 = vmatpush1.msra.mxu0 0.0
    %500 = vmatprep.subr.mxu0 0.0
    %501 = vmatpush1.msra.mxu0 0.0
    %502 = vmatprep.subr.mxu0 %v162
    %503 = vmatpush1.msra.mxu0 %v161
    %504 = vmatprep.subr.mxu0 %v144
    %505 = vmatpush1.msra.mxu0 %v143
    %506 = vmatprep.subr.mxu0 %v126
    %507 = vmatpush1.msra.mxu0 %v125
    %508 = vmatprep.subr.mxu0 %v108
    %509 = vmatpush1.msra.mxu0 %v107
    %510 = vmatprep.subr.mxu0 %v90
    %511 = vmatpush1.msra.mxu0 %v89
    %512 = vmatprep.subr.mxu0 %v72
    %513 = vmatpush1.msra.mxu0 %v71
    %514 = vmatprep.subr.mxu0 %v54
    %515 = vmatpush1.msra.mxu0 %v53
    %516 = vmatprep.subr.mxu0 %v36
    %517 = vmatpush1.msra.mxu0 %v35
    %518 = vmatprep.subr.mxu0 0.0
    %519 = vmatpush2.msra.mxu0 0.0
    %520 = vmatprep.subr.mxu0 0.0
    %521 = vmatpush2.msra.mxu0 0.0
    %522 = vmatprep.subr.mxu0 0.0
    %523 = vmatpush2.msra.mxu0 0.0
    %524 = vmatprep.subr.mxu0 0.0
    %525 = vmatpush2.msra.mxu0 0.0
    %526 = vmatprep.subr.mxu0 0.0
    %527 = vmatpush2.msra.mxu0 0.0
    %528 = vmatprep.subr.mxu0 0.0
    %529 = vmatpush2.msra.mxu0 0.0
    %530 = vmatprep.subr.mxu0 0.0
    %531 = vmatpush2.msra.mxu0 0.0
    %532 = vmatprep.subr.mxu0 0.0
    %533 = vmatpush2.msra.mxu0 0.0
    %534 = vmatprep.subr.mxu0 0.0
    %535 = vmatpush2.msra.mxu0 0.0
    %536 = vmatprep.subr.mxu0 0.0
    %537 = vmatpush2.msra.mxu0 0.0
    %538 = vmatprep.subr.mxu0 0.0
    %539 = vmatpush2.msra.mxu0 0.0
    %540 = vmatprep.subr.mxu0 0.0
    %541 = vmatpush2.msra.mxu0 0.0
    %542 = vmatprep.subr.mxu0 0.0
    %543 = vmatpush2.msra.mxu0 0.0
    %544 = vmatprep.subr.mxu0 0.0
    %545 = vmatpush2.msra.mxu0 0.0
    %546 = vmatprep.subr.mxu0 0.0
    %547 = vmatpush2.msra.mxu0 0.0
    %548 = vmatprep.subr.mxu0 0.0
    %549 = vmatpush2.msra.mxu0 0.0
    %550 = vmatprep.mubr.f32.mxu0 0.0
    %551 = vmatmul.mubr.f32.gmra.mxu0 %v271
    %v552 = vpop.f32.mrf.mxu0
    %v553 = vadd.f32 %v206, %v552
    %v554 = vpop.f32.mrf.mxu0
    %v555 = vadd.f32 %v210, %v554
    %556 = vdwg.mxu0
    %557 = vmatprep.subr.mxu0 0.0
    %558 = vmatpush1.msra.mxu0 0.0
    %559 = vmatprep.subr.mxu0 0.0
    %560 = vmatpush1.msra.mxu0 0.0
    %561 = vmatprep.subr.mxu0 0.0
    %562 = vmatpush1.msra.mxu0 0.0
    %563 = vmatprep.subr.mxu0 0.0
    %564 = vmatpush1.msra.mxu0 0.0
    %565 = vmatprep.subr.mxu0 0.0
    %566 = vmatpush1.msra.mxu0 0.0
    %567 = vmatprep.subr.mxu0 0.0
    %568 = vmatpush1.msra.mxu0 0.0
    %569 = vmatprep.subr.mxu0 0.0
    %570 = vmatpush1.msra.mxu0 0.0
    %571 = vmatprep.subr.mxu0 0.0
    %572 = vmatpush1.msra.mxu0 0.0
    %573 = vmatprep.subr.mxu0 %v164
    %574 = vmatpush1.msra.mxu0 %v163
    %575 = vmatprep.subr.mxu0 %v146
    %576 = vmatpush1.msra.mxu0 %v145
    %577 = vmatprep.subr.mxu0 %v128
    %578 = vmatpush1.msra.mxu0 %v127
    %579 = vmatprep.subr.mxu0 %v110
    %580 = vmatpush1.msra.mxu0 %v109
    %581 = vmatprep.subr.mxu0 %v92
    %582 = vmatpush1.msra.mxu0 %v91
    %583 = vmatprep.subr.mxu0 %v74
    %584 = vmatpush1.msra.mxu0 %v73
    %585 = vmatprep.subr.mxu0 %v56
    %586 = vmatpush1.msra.mxu0 %v55
    %587 = vmatprep.subr.mxu0 %v38
    %588 = vmatpush1.msra.mxu0 %v37
    %589 = vmatprep.subr.mxu0 0.0
    %590 = vmatpush2.msra.mxu0 0.0
    %591 = vmatprep.subr.mxu0 0.0
    %592 = vmatpush2.msra.mxu0 0.0
    %593 = vmatprep.subr.mxu0 0.0
    %594 = vmatpush2.msra.mxu0 0.0
    %595 = vmatprep.subr.mxu0 0.0
    %596 = vmatpush2.msra.mxu0 0.0
    %597 = vmatprep.subr.mxu0 0.0
    %598 = vmatpush2.msra.mxu0 0.0
    %599 = vmatprep.subr.mxu0 0.0
    %600 = vmatpush2.msra.mxu0 0.0
    %601 = vmatprep.subr.mxu0 0.0
    %602 = vmatpush2.msra.mxu0 0.0
    %603 = vmatprep.subr.mxu0 0.0
    %604 = vmatpush2.msra.mxu0 0.0
    %605 = vmatprep.subr.mxu0 0.0
    %606 = vmatpush2.msra.mxu0 0.0
    %607 = vmatprep.subr.mxu0 0.0
    %608 = vmatpush2.msra.mxu0 0.0
    %609 = vmatprep.subr.mxu0 0.0
    %610 = vmatpush2.msra.mxu0 0.0
    %611 = vmatprep.subr.mxu0 0.0
    %612 = vmatpush2.msra.mxu0 0.0
    %613 = vmatprep.subr.mxu0 0.0
    %614 = vmatpush2.msra.mxu0 0.0
    %615 = vmatprep.subr.mxu0 0.0
    %616 = vmatpush2.msra.mxu0 0.0
    %617 = vmatprep.subr.mxu0 0.0
    %618 = vmatpush2.msra.mxu0 0.0
    %619 = vmatprep.subr.mxu0 0.0
    %620 = vmatpush2.msra.mxu0 0.0
    %621 = vmatprep.mubr.f32.mxu0 0.0
    %622 = vmatmul.mubr.f32.gmra.mxu0 %v271
    %v623 = vpop.f32.mrf.mxu0
    %v624 = vadd.f32 %v214, %v623
    %v625 = vpop.f32.mrf.mxu0
    %v626 = vadd.f32 %v218, %v625
    %627 = vdwg.mxu0
    %628 = vmatprep.subr.mxu0 0.0
    %629 = vmatpush1.msra.mxu0 0.0
    %630 = vmatprep.subr.mxu0 0.0
    %631 = vmatpush1.msra.mxu0 0.0
    %632 = vmatprep.subr.mxu0 0.0
    %633 = vmatpush1.msra.mxu0 0.0
    %634 = vmatprep.subr.mxu0 0.0
    %635 = vmatpush1.msra.mxu0 0.0
    %636 = vmatprep.subr.mxu0 0.0
    %637 = vmatpush1.msra.mxu0 0.0
    %638 = vmatprep.subr.mxu0 0.0
    %639 = vmatpush1.msra.mxu0 0.0
    %640 = vmatprep.subr.mxu0 0.0
    %641 = vmatpush1.msra.mxu0 0.0
    %642 = vmatprep.subr.mxu0 0.0
    %643 = vmatpush1.msra.mxu0 0.0
    %644 = vmatprep.subr.mxu0 %v166
    %645 = vmatpush1.msra.mxu0 %v165
    %646 = vmatprep.subr.mxu0 %v148
    %647 = vmatpush1.msra.mxu0 %v147
    %648 = vmatprep.subr.mxu0 %v130
    %649 = vmatpush1.msra.mxu0 %v129
    %650 = vmatprep.subr.mxu0 %v112
    %651 = vmatpush1.msra.mxu0 %v111
    %652 = vmatprep.subr.mxu0 %v94
    %653 = vmatpush1.msra.mxu0 %v93
    %654 = vmatprep.subr.mxu0 %v76
    %655 = vmatpush1.msra.mxu0 %v75
    %656 = vmatprep.subr.mxu0 %v58
    %657 = vmatpush1.msra.mxu0 %v57
    %658 = vmatprep.subr.mxu0 %v40
    %659 = vmatpush1.msra.mxu0 %v39
    %660 = vmatprep.subr.mxu0 0.0
    %661 = vmatpush2.msra.mxu0 0.0
    %662 = vmatprep.subr.mxu0 0.0
    %663 = vmatpush2.msra.mxu0 0.0
    %664 = vmatprep.subr.mxu0 0.0
    %665 = vmatpush2.msra.mxu0 0.0
    %666 = vmatprep.subr.mxu0 0.0
    %667 = vmatpush2.msra.mxu0 0.0
    %668 = vmatprep.subr.mxu0 0.0
    %669 = vmatpush2.msra.mxu0 0.0
    %670 = vmatprep.subr.mxu0 0.0
    %671 = vmatpush2.msra.mxu0 0.0
    %672 = vmatprep.subr.mxu0 0.0
    %673 = vmatpush2.msra.mxu0 0.0
    %674 = vmatprep.subr.mxu0 0.0
    %675 = vmatpush2.msra.mxu0 0.0
    %676 = vmatprep.subr.mxu0 0.0
    %677 = vmatpush2.msra.mxu0 0.0
    %678 = vmatprep.subr.mxu0 0.0
    %679 = vmatpush2.msra.mxu0 0.0
    %680 = vmatprep.subr.mxu0 0.0
    %681 = vmatpush2.msra.mxu0 0.0
    %682 = vmatprep.subr.mxu0 0.0
    %683 = vmatpush2.msra.mxu0 0.0
    %684 = vmatprep.subr.mxu0 0.0
    %685 = vmatpush2.msra.mxu0 0.0
    %686 = vmatprep.subr.mxu0 0.0
    %687 = vmatpush2.msra.mxu0 0.0
    %688 = vmatprep.subr.mxu0 0.0
    %689 = vmatpush2.msra.mxu0 0.0
    %690 = vmatprep.subr.mxu0 0.0
    %691 = vmatpush2.msra.mxu0 0.0
    %692 = vmatprep.mubr.f32.mxu0 0.0
    %693 = vmatmul.mubr.f32.gmra.mxu0 %v271
    %v694 = vpop.f32.mrf.mxu0
    %v695 = vadd.f32 %v222, %v694
    %v696 = vpop.f32.mrf.mxu0
    %v697 = vadd.f32 %v226, %v696
    %698 = vdwg.mxu0
    %699 = vmatprep.subr.mxu0 0.0
    %700 = vmatpush1.msra.mxu0 0.0
    %701 = vmatprep.subr.mxu0 0.0
    %702 = vmatpush1.msra.mxu0 0.0
    %703 = vmatprep.subr.mxu0 0.0
    %704 = vmatpush1.msra.mxu0 0.0
    %705 = vmatprep.subr.mxu0 0.0
    %706 = vmatpush1.msra.mxu0 0.0
    %707 = vmatprep.subr.mxu0 0.0
    %708 = vmatpush1.msra.mxu0 0.0
    %709 = vmatprep.subr.mxu0 0.0
    %710 = vmatpush1.msra.mxu0 0.0
    %711 = vmatprep.subr.mxu0 0.0
    %712 = vmatpush1.msra.mxu0 0.0
    %713 = vmatprep.subr.mxu0 0.0
    %714 = vmatpush1.msra.mxu0 0.0
    %715 = vmatprep.subr.mxu0 %v168
    %716 = vmatpush1.msra.mxu0 %v167
    %717 = vmatprep.subr.mxu0 %v150
    %718 = vmatpush1.msra.mxu0 %v149
    %719 = vmatprep.subr.mxu0 %v132
    %720 = vmatpush1.msra.mxu0 %v131
    %721 = vmatprep.subr.mxu0 %v114
    %722 = vmatpush1.msra.mxu0 %v113
    %723 = vmatprep.subr.mxu0 %v96
    %724 = vmatpush1.msra.mxu0 %v95
    %725 = vmatprep.subr.mxu0 %v78
    %726 = vmatpush1.msra.mxu0 %v77
    %727 = vmatprep.subr.mxu0 %v60
    %728 = vmatpush1.msra.mxu0 %v59
    %729 = vmatprep.subr.mxu0 %v42
    %730 = vmatpush1.msra.mxu0 %v41
    %731 = vmatprep.subr.mxu0 0.0
    %732 = vmatpush2.msra.mxu0 0.0
    %733 = vmatprep.subr.mxu0 0.0
    %734 = vmatpush2.msra.mxu0 0.0
    %735 = vmatprep.subr.mxu0 0.0
    %736 = vmatpush2.msra.mxu0 0.0
    %737 = vmatprep.subr.mxu0 0.0
    %738 = vmatpush2.msra.mxu0 0.0
    %739 = vmatprep.subr.mxu0 0.0
    %740 = vmatpush2.msra.mxu0 0.0
    %741 = vmatprep.subr.mxu0 0.0
    %742 = vmatpush2.msra.mxu0 0.0
    %743 = vmatprep.subr.mxu0 0.0
    %744 = vmatpush2.msra.mxu0 0.0
    %745 = vmatprep.subr.mxu0 0.0
    %746 = vmatpush2.msra.mxu0 0.0
    %747 = vmatprep.subr.mxu0 0.0
    %748 = vmatpush2.msra.mxu0 0.0
    %749 = vmatprep.subr.mxu0 0.0
    %750 = vmatpush2.msra.mxu0 0.0
    %751 = vmatprep.subr.mxu0 0.0
    %752 = vmatpush2.msra.mxu0 0.0
    %753 = vmatprep.subr.mxu0 0.0
    %754 = vmatpush2.msra.mxu0 0.0
    %755 = vmatprep.subr.mxu0 0.0
    %756 = vmatpush2.msra.mxu0 0.0
    %757 = vmatprep.subr.mxu0 0.0
    %758 = vmatpush2.msra.mxu0 0.0
    %759 = vmatprep.subr.mxu0 0.0
    %760 = vmatpush2.msra.mxu0 0.0
    %761 = vmatprep.subr.mxu0 0.0
    %762 = vmatpush2.msra.mxu0 0.0
    %763 = vmatprep.mubr.f32.mxu0 0.0
    %764 = vmatmul.mubr.f32.gmra.mxu0 %v271
    %v765 = vpop.f32.mrf.mxu0
    %v766 = vadd.f32 %v230, %v765
    %v767 = vpop.f32.mrf.mxu0
    %v768 = vadd.f32 %v234, %v767
    %769 = vdwg.mxu0
    %770 = vmatprep.subr.mxu0 0.0
    %771 = vmatpush1.msra.mxu0 0.0
    %772 = vmatprep.subr.mxu0 0.0
    %773 = vmatpush1.msra.mxu0 0.0
    %774 = vmatprep.subr.mxu0 0.0
    %775 = vmatpush1.msra.mxu0 0.0
    %776 = vmatprep.subr.mxu0 0.0
    %777 = vmatpush1.msra.mxu0 0.0
    %778 = vmatprep.subr.mxu0 0.0
    %779 = vmatpush1.msra.mxu0 0.0
    %780 = vmatprep.subr.mxu0 0.0
    %781 = vmatpush1.msra.mxu0 0.0
    %782 = vmatprep.subr.mxu0 0.0
    %783 = vmatpush1.msra.mxu0 0.0
    %784 = vmatprep.subr.mxu0 0.0
    %785 = vmatpush1.msra.mxu0 0.0
    %786 = vmatprep.subr.mxu0 %v170
    %787 = vmatpush1.msra.mxu0 %v169
    %788 = vmatprep.subr.mxu0 %v152
    %789 = vmatpush1.msra.mxu0 %v151
    %790 = vmatprep.subr.mxu0 %v134
    %791 = vmatpush1.msra.mxu0 %v133
    %792 = vmatprep.subr.mxu0 %v116
    %793 = vmatpush1.msra.mxu0 %v115
    %794 = vmatprep.subr.mxu0 %v98
    %795 = vmatpush1.msra.mxu0 %v97
    %796 = vmatprep.subr.mxu0 %v80
    %797 = vmatpush1.msra.mxu0 %v79
    %798 = vmatprep.subr.mxu0 %v62
    %799 = vmatpush1.msra.mxu0 %v61
    %800 = vmatprep.subr.mxu0 %v44
    %801 = vmatpush1.msra.mxu0 %v43
    %802 = vmatprep.subr.mxu0 0.0
    %803 = vmatpush2.msra.mxu0 0.0
    %804 = vmatprep.subr.mxu0 0.0
    %805 = vmatpush2.msra.mxu0 0.0
    %806 = vmatprep.subr.mxu0 0.0
    %807 = vmatpush2.msra.mxu0 0.0
    %808 = vmatprep.subr.mxu0 0.0
    %809 = vmatpush2.msra.mxu0 0.0
    %810 = vmatprep.subr.mxu0 0.0
    %811 = vmatpush2.msra.mxu0 0.0
    %812 = vmatprep.subr.mxu0 0.0
    %813 = vmatpush2.msra.mxu0 0.0
    %814 = vmatprep.subr.mxu0 0.0
    %815 = vmatpush2.msra.mxu0 0.0
    %816 = vmatprep.subr.mxu0 0.0
    %817 = vmatpush2.msra.mxu0 0.0
    %818 = vmatprep.subr.mxu0 0.0
    %819 = vmatpush2.msra.mxu0 0.0
    %820 = vmatprep.subr.mxu0 0.0
    %821 = vmatpush2.msra.mxu0 0.0
    %822 = vmatprep.subr.mxu0 0.0
    %823 = vmatpush2.msra.mxu0 0.0
    %824 = vmatprep.subr.mxu0 0.0
    %825 = vmatpush2.msra.mxu0 0.0
    %826 = vmatprep.subr.mxu0 0.0
    %827 = vmatpush2.msra.mxu0 0.0
    %828 = vmatprep.subr.mxu0 0.0
    %829 = vmatpush2.msra.mxu0 0.0
    %830 = vmatprep.subr.mxu0 0.0
    %831 = vmatpush2.msra.mxu0 0.0
    %832 = vmatprep.subr.mxu0 0.0
    %833 = vmatpush2.msra.mxu0 0.0
    %834 = vmatprep.mubr.f32.mxu0 0.0
    %835 = vmatmul.mubr.f32.gmra.mxu0 %v271
    %v836 = vpop.f32.mrf.mxu0
    %v837 = vadd.f32 %v238, %v836
    %v838 = vpop.f32.mrf.mxu0
    %v839 = vadd.f32 %v242, %v838
    %840 = vdwg.mxu0
    %841 = vmatprep.subr.mxu0 0.0
    %842 = vmatpush1.msra.mxu0 0.0
    %843 = vmatprep.subr.mxu0 0.0
    %844 = vmatpush1.msra.mxu0 0.0
    %845 = vmatprep.subr.mxu0 0.0
    %846 = vmatpush1.msra.mxu0 0.0
    %847 = vmatprep.subr.mxu0 0.0
    %848 = vmatpush1.msra.mxu0 0.0
    %849 = vmatprep.subr.mxu0 0.0
    %850 = vmatpush1.msra.mxu0 0.0
    %851 = vmatprep.subr.mxu0 0.0
    %852 = vmatpush1.msra.mxu0 0.0
    %853 = vmatprep.subr.mxu0 0.0
    %854 = vmatpush1.msra.mxu0 0.0
    %855 = vmatprep.subr.mxu0 0.0
    %856 = vmatpush1.msra.mxu0 0.0
    %857 = vmatprep.subr.mxu0 %v172
    %858 = vmatpush1.msra.mxu0 %v171
    %859 = vmatprep.subr.mxu0 %v154
    %860 = vmatpush1.msra.mxu0 %v153
    %861 = vmatprep.subr.mxu0 %v136
    %862 = vmatpush1.msra.mxu0 %v135
    %863 = vmatprep.subr.mxu0 %v118
    %864 = vmatpush1.msra.mxu0 %v117
    %865 = vmatprep.subr.mxu0 %v100
    %866 = vmatpush1.msra.mxu0 %v99
    %867 = vmatprep.subr.mxu0 %v82
    %868 = vmatpush1.msra.mxu0 %v81
    %869 = vmatprep.subr.mxu0 %v64
    %870 = vmatpush1.msra.mxu0 %v63
    %871 = vmatprep.subr.mxu0 %v46
    %872 = vmatpush1.msra.mxu0 %v45
    %873 = vmatprep.subr.mxu0 0.0
    %874 = vmatpush2.msra.mxu0 0.0
    %875 = vmatprep.subr.mxu0 0.0
    %876 = vmatpush2.msra.mxu0 0.0
    %877 = vmatprep.subr.mxu0 0.0
    %878 = vmatpush2.msra.mxu0 0.0
    %879 = vmatprep.subr.mxu0 0.0
    %880 = vmatpush2.msra.mxu0 0.0
    %881 = vmatprep.subr.mxu0 0.0
    %882 = vmatpush2.msra.mxu0 0.0
    %883 = vmatprep.subr.mxu0 0.0
    %884 = vmatpush2.msra.mxu0 0.0
    %885 = vmatprep.subr.mxu0 0.0
    %886 = vmatpush2.msra.mxu0 0.0
    %887 = vmatprep.subr.mxu0 0.0
    %888 = vmatpush2.msra.mxu0 0.0
    %889 = vmatprep.subr.mxu0 0.0
    %890 = vmatpush2.msra.mxu0 0.0
    %891 = vmatprep.subr.mxu0 0.0
    %892 = vmatpush2.msra.mxu0 0.0
    %893 = vmatprep.subr.mxu0 0.0
    %894 = vmatpush2.msra.mxu0 0.0
    %895 = vmatprep.subr.mxu0 0.0
    %896 = vmatpush2.msra.mxu0 0.0
    %897 = vmatprep.subr.mxu0 0.0
    %898 = vmatpush2.msra.mxu0 0.0
    %899 = vmatprep.subr.mxu0 0.0
    %900 = vmatpush2.msra.mxu0 0.0
    %901 = vmatprep.subr.mxu0 0.0
    %902 = vmatpush2.msra.mxu0 0.0
    %903 = vmatprep.subr.mxu0 0.0
    %904 = vmatpush2.msra.mxu0 0.0
    %905 = vmatprep.mubr.f32.mxu0 0.0
    %906 = vmatmul.mubr.f32.gmra.mxu0 %v271
    %v907 = vpop.f32.mrf.mxu0
    %v908 = vadd.f32 %v246, %v907
    %v909 = vpop.f32.mrf.mxu0
    %v910 = vadd.f32 %v250, %v909
    %911 = vdwg.mxu0
    %v930 = vcombine.low %v340, %v342
    %v931 = vcombine.low %v411, %v413
    %v932 = vcombine.low %v482, %v484
    %v933 = vcombine.low %v553, %v555
    %v935 = vunpack.c.l.s4 1966171168
    %v936 = vunpack.c.0.s8 %v935
    %v937 = vlaneseq
    %v938 = vshrl.u32 %v937, 7
    %v939 = vsub.s32 %v936, %v938
    %v940 = vrot.slane %v930, %v939
    %v942 = vunpack.c.l.s4 1966171168
    %v943 = vunpack.c.0.s8 %v942
    %v944 = vlaneseq
    %v945 = vshrl.u32 %v944, 7
    %v946 = vsub.s32 %v943, %v945
    %v947 = vrot.slane %v931, %v946
    %v949 = vunpack.c.l.s4 1966171168
    %v950 = vunpack.c.0.s8 %v949
    %v951 = vlaneseq
    %v952 = vshrl.u32 %v951, 7
    %v953 = vsub.s32 %v950, %v952
    %v954 = vrot.slane %v932, %v953
    %v956 = vunpack.c.l.s4 1966171168
    %v957 = vunpack.c.0.s8 %v956
    %v958 = vlaneseq
    %v959 = vshrl.u32 %v958, 7
    %v960 = vsub.s32 %v957, %v959
    %v961 = vrot.slane %v933, %v960
    %v962 = vcombine.low %v940, %v947
    %v963 = vcombine.low %v954, %v961
    %v965 = vunpack.c.l.s4 1966171168
    %v966 = vunpack.c.0.s8 %v965
    %v967 = vlaneseq
    %v968 = vshrl.u32 %v967, 7
    %v969 = vsub.s32 %v966, %v968
    %v970 = vrot.slane %v962, %v969
    %v972 = vunpack.c.l.s4 1966171168
    %v973 = vunpack.c.0.s8 %v972
    %v974 = vlaneseq
    %v975 = vshrl.u32 %v974, 7
    %v976 = vsub.s32 %v973, %v975
    %v977 = vrot.slane %v963, %v976
    %v978 = vcombine.low %v970, %v977
    %v979 = vcombine.low %v624, %v626
    %v980 = vcombine.low %v695, %v697
    %v981 = vcombine.low %v766, %v768
    %v982 = vcombine.low %v837, %v839
    %v984 = vunpack.c.l.s4 1966171168
    %v985 = vunpack.c.0.s8 %v984
    %v986 = vlaneseq
    %v987 = vshrl.u32 %v986, 7
    %v988 = vsub.s32 %v985, %v987
    %v989 = vrot.slane %v979, %v988
    %v991 = vunpack.c.l.s4 1966171168
    %v992 = vunpack.c.0.s8 %v991
    %v993 = vlaneseq
    %v994 = vshrl.u32 %v993, 7
    %v995 = vsub.s32 %v992, %v994
    %v996 = vrot.slane %v980, %v995
    %v998 = vunpack.c.l.s4 1966171168
    %v999 = vunpack.c.0.s8 %v998
    %v1000 = vlaneseq
    %v1001 = vshrl.u32 %v1000, 7
    %v1002 = vsub.s32 %v999, %v1001
    %v1003 = vrot.slane %v981, %v1002
    %v1005 = vunpack.c.l.s4 1966171168
    %v1006 = vunpack.c.0.s8 %v1005
    %v1007 = vlaneseq
    %v1008 = vshrl.u32 %v1007, 7
    %v1009 = vsub.s32 %v1006, %v1008
    %v1010 = vrot.slane %v982, %v1009
    %v1011 = vcombine.low %v989, %v996
    %v1012 = vcombine.low %v1003, %v1010
    %v1014 = vunpack.c.l.s4 1966171168
    %v1015 = vunpack.c.0.s8 %v1014
    %v1016 = vlaneseq
    %v1017 = vshrl.u32 %v1016, 7
    %v1018 = vsub.s32 %v1015, %v1017
    %v1019 = vrot.slane %v1011, %v1018
    %v1021 = vunpack.c.l.s4 1966171168
    %v1022 = vunpack.c.0.s8 %v1021
    %v1023 = vlaneseq
    %v1024 = vshrl.u32 %v1023, 7
    %v1025 = vsub.s32 %v1022, %v1024
    %v1026 = vrot.slane %v1012, %v1025
    %v1027 = vcombine.low %v1019, %v1026
    %v1028 = vcombine.low %v908, %v910
    %v1030 = vunpack.c.l.s4 1966171168
    %v1031 = vunpack.c.0.s8 %v1030
    %v1032 = vlaneseq
    %v1033 = vshrl.u32 %v1032, 7
    %v1034 = vsub.s32 %v1031, %v1033
    %v1035 = vrot.slane %v1028, %v1034
    %v1037 = vunpack.c.l.s4 1966171168
    %v1038 = vunpack.c.0.s8 %v1037
    %v1039 = vlaneseq
    %v1040 = vshrl.u32 %v1039, 7
    %v1041 = vsub.s32 %v1038, %v1040
    %v1042 = vrot.slane %v1035, %v1041
    %1046 = vst [vmem:[%s3] sm:$0xff] %v978
    %1047 = vst [vmem:[%s3 + $0x8] sm:$0xff] %v1027
    %v1048 = vlaneseq
    %vm1049 = vcmp.ge.s32.totalorder %v1048, 0
    %vm1050 = vcmp.lt.s32.totalorder %v1048, 256
    %vm1051 = vmand %vm1049, %vm1050
    %1052 = vst.msk [vmem:[%s3 + $0x10] sm:$0x3] %vm1051, %v1042
    // Predicated region
    $region18: #{hypernetwork_conv_batched.1} parent=1 // pred_check
      _
    $region19: #{hypernetwork_conv_batched.1} parent=1 // pred_check_branch
      %1054 = sbr.rel (0) target = $region21
    $region20: #{hypernetwork_conv_batched.1} parent=1 // pred_region
      _
    $region21: #{hypernetwork_conv_batched.1} parent=1 // pred_fallthru
      _
    // Predicated region
    $region22: #{hypernetwork_conv_batched.1} parent=1 // pred_check
      _
    $region23: #{hypernetwork_conv_batched.1} parent=1 // pred_check_branch
      %1056 = sbr.rel (0) target = $region25
    $region24: #{hypernetwork_conv_batched.1} parent=1 // pred_region
      _
    $region25: #{hypernetwork_conv_batched.1} parent=1 // pred_fallthru
      _
    %1057 = vsyncpa [#allocation3], 1

</llo_original>
